<compile_context>
chip_gen: v5e
topology: v5e:2x2
jax: 0.10.0
libtpu: 0.0.40
codegen_flags: <defaults>
</compile_context>

<pallas_src>
import jax
import jax.numpy as jnp
from jax import lax
from jax.experimental import pallas as pl
from jax.experimental.pallas import tpu as pltpu


def _round_up(x, m):
    return ((x + m - 1) // m) * m


def _tpu_vmem_bytes():
    """Per-core VMEM capacity; conservative fallback = smallest current part (v7x 64 MiB)."""
    try:
        return int(pltpu.get_tpu_info().vmem_capacity_bytes)
    except Exception:
        return 64 << 20


# ---------------------------------------------------------------------------
# Pallas kernel: batch-tiled obs @ mean with a lane-dense single-row output
# ---------------------------------------------------------------------------
def _obs_matvec_kernel(obs_ref, mean_ref, out_ref):
    # obs_ref : (TB, D)   streaming batch tile (feature axis = full, unpadded extent)
    # mean_ref: (8, D)    row 0 = posterior mean, rows 1..7 = 0 (VMEM-resident)
    # out_ref : (1, TB)   row 0 = obs_tile @ mean (lane-dense)
    res = lax.dot_general(
        mean_ref[...], obs_ref[...],
        dimension_numbers=(((1,), (1,)), ((), ())),   # contract feature axes (NT matmul)
        preferred_element_type=jnp.float32,
        precision=lax.Precision.HIGHEST,              # kernel is mem-bound -> free
    )
    out_ref[...] = res[0:1, :]


def _obs_matvec_pallas(obs, mean):
    """Compute out[i] = obs[i, :] @ mean with a batch-tiled Pallas pipeline."""
    obs = jnp.asarray(obs, jnp.float32)
    mean = jnp.asarray(mean, jnp.float32)
    batch, dim = obs.shape

    # ---- derive the batch tile from an explicit VMEM byte budget -------------
    vmem_bytes = _tpu_vmem_bytes()
    # Double-buffered obs-tile budget: ~12 MiB on 128 MiB parts (v5e/v6e),
    # ~10.6 MiB on 64 MiB parts (v7x).
    budget = min(12 << 20, vmem_bytes // 6)
    rows = budget // (2 * dim * 4)
    tb = max(128, (rows // 128) * 128)          # multiple of 128 -> lane-dense output stores
    tb = min(tb, 4096)
    tb = min(tb, _round_up(batch, 128))
    if batch > 256:
        # Keep >= 2 grid steps so the "parallel" batch axis can actually shard
        # across both v7x TensorCores (single-TC v5e/v6e: near no-op).
        tb = min(tb, max(128, _round_up(batch, 256) // 2))
    grid = pl.cdiv(batch, tb)

    # VMEM limit with headroom: double-buffered obs tile + mean slab + out rows.
    needed = 2 * tb * dim * 4 + 2 * 8 * dim * 4 + 2 * tb * 4
    vmem_limit = int(min(max(vmem_bytes - (8 << 20), 16 << 20),
                         max(2 * needed + (2 << 20), 16 << 20)))

    mean_slab = jnp.zeros((8, dim), jnp.float32).at[0, :].set(mean)

    out = pl.pallas_call(
        _obs_matvec_kernel,
        out_shape=jax.ShapeDtypeStruct((1, batch), jnp.float32),
        grid_spec=pltpu.PrefetchScalarGridSpec(
            num_scalar_prefetch=0,
            grid=(grid,),
            in_specs=[
                pl.BlockSpec((tb, dim), lambda i: (i, 0)),  # obs tile streams (no HBM pad copy)
                pl.BlockSpec((8, dim), lambda i: (0, 0)),   # mean stays resident
            ],
            out_specs=pl.BlockSpec((1, tb), lambda i: (0, i)),
        ),
        compiler_params=pltpu.CompilerParams(
            dimension_semantics=("parallel",),   # shard batch tiles across TCs on v7x
            vmem_limit_bytes=vmem_limit,
        ),
        cost_estimate=pl.CostEstimate(
            flops=2 * batch * dim,
            transcendentals=0,
            bytes_accessed=4 * (batch * dim + 8 * dim + batch),
        ),
    )(obs, mean_slab)
    return out[0]


# ---------------------------------------------------------------------------
# Module-equivalent wrapper (plain-JAX glue: preprocessing, correction, SVD,
# cached batch-invariant posterior-mean vector)
# ---------------------------------------------------------------------------
class OnlineBayesLinRegPallas:
    def __init__(self, input_size, out_std, bias=False, use_mean=False,
                 eps=1e-6, decay_factor=0.0):
        self.dim = input_size + int(bias)
        self._bias = bias
        self._eps = float(eps)
        self._decay_factor = float(decay_factor)
        self._use_mean = use_mean
        self.out_std = out_std
        self._identity = jnp.eye(self.dim, dtype=jnp.float32)
        # posterior state (written by .update()), matching the torch init
        self.scaled_mean = jnp.zeros((self.dim,), dtype=jnp.float32)
        self.scaled_precision = jnp.eye(self.dim, dtype=jnp.float32)
        self._cached_mean = None   # memoized posterior mean (invalidated by update())

    @staticmethod
    def _prepend_unit_vector(obs):
        ones = jnp.ones(obs.shape[:-1] + (1,), dtype=obs.dtype)
        return jnp.concatenate([ones, obs], axis=-1)

    def preprocess_inputs(self, obs):
        obs = jnp.asarray(obs, dtype=jnp.float32)
        if obs.ndim == 1:
            obs = obs[None, :]
        if self._bias:
            obs = self._prepend_unit_vector(obs)
        return obs

    def update(self, observations, responses):
        obs = self.preprocess_inputs(observations)
        resp = jnp.asarray(responses, dtype=jnp.float32)
        n = resp.shape[0]
        if n == 0:
            return
        if self._decay_factor:
            expo = jnp.arange(n - 1, -1, -1, dtype=jnp.float32)
            decay = (1.0 - self._decay_factor) ** expo
            shrink = (1.0 - self._decay_factor) ** n
            if self._use_mean:
                self.scaled_mean = self.scaled_mean * shrink + obs.T @ (resp * decay)
            dobs = obs * jnp.sqrt(decay)[:, None]
            self.scaled_precision = self.scaled_precision * shrink + dobs.T @ dobs
        else:
            if self._use_mean:
                self.scaled_mean = self.scaled_mean + obs.T @ resp
            self.scaled_precision = self.scaled_precision + obs.T @ obs
        self._cached_mean = None   # posterior changed -> invalidate memo

    def _posterior_mean(self):
        """Batch-invariant O(dim^3) work, computed once per posterior update."""
        if self._cached_mean is not None:
            return self._cached_mean
        prec = self.scaled_precision
        correction = (1.0 + jnp.mean(jnp.abs(jnp.diag(prec)))) * self._eps * self._identity
        # SVD has no Pallas equivalent -> plain JAX.
        u, s, _ = jnp.linalg.svd(prec + correction)
        # torch semantics: s[s != 0] = 1/s[s != 0]; s[s < eps] = eps
        s_inv = jnp.where(s != 0.0, 1.0 / jnp.where(s == 0.0, 1.0, s), 0.0)
        s_inv = jnp.where(s_inv < self._eps, self._eps, s_inv)
        # mean = U diag(s_inv) U^T scaled_mean, without materializing the covariance.
        self._cached_mean = u @ (s_inv * (u.T @ self.scaled_mean))
        return self._cached_mean

    def forward(self, observations):
        obs = self.preprocess_inputs(observations)
        mean = self._posterior_mean()
        # Batch-dependent hot path (obs @ mean) runs in the Pallas kernel.
        return _obs_matvec_pallas(obs, mean)

    # pure-JAX reference (follows the original torch formulation literally)
    def forward_ref(self, observations):
        obs = self.preprocess_inputs(observations)
        prec = self.scaled_precision
        correction = (1.0 + jnp.mean(jnp.abs(jnp.diag(prec)))) * self._eps * self._identity
        u, s, _ = jnp.linalg.svd(prec + correction)
        s_inv = jnp.where(s != 0.0, 1.0 / jnp.where(s == 0.0, 1.0, s), 0.0)
        s_inv = jnp.where(s_inv < self._eps, self._eps, s_inv)
        scaled_covar = u @ jnp.diag(s_inv) @ u.T
        return obs @ (scaled_covar @ self.scaled_mean)


# ---------------------------------------------------------------------------
if __name__ == "__main__":
    key = jax.random.PRNGKey(0)
    k1, k2, k3 = jax.random.split(key, 3)

    input_size = 31          # + bias column -> dim = 32
    batch = 4
    n_hist = 16              # synthetic "past observations" to build the posterior

    model = OnlineBayesLinRegPallas(input_size, out_std=0.5, bias=True,
                                    use_mean=True, eps=1e-6)

    # Build a non-trivial posterior state deterministically via one update().
    hist_obs = jax.random.normal(k1, (n_hist, input_size), dtype=jnp.float32)
    hist_resp = jax.random.normal(k2, (n_hist,), dtype=jnp.float32)
    model.update(hist_obs, hist_resp)

    # Query observations.
    x = jax.random.normal(k3, (batch, input_size), dtype=jnp.float32)

    out = jax.block_until_ready(model.forward(x))
    ref = model.forward_ref(x)

    assert out.shape == (batch,), out.shape
    assert jnp.allclose(out, ref, rtol=1e-4, atol=1e-5), (out, ref)

    print("KERNEL_OK")
</pallas_src>

<mosaic_0001>
module attributes {stable_mosaic.version = 11 : i64} {
  func.func @_obs_matvec_kernel(%arg0: i32, %arg1: memref<128x32xf32, #tpu.memory_space<vmem>>, %arg2: memref<8x32xf32, #tpu.memory_space<vmem>>, %arg3: memref<1x128xf32, #tpu.memory_space<vmem>>) attributes {dimension_semantics = [#tpu.dimension_semantics<parallel>], iteration_bounds = array<i64: 1>, scalar_prefetch = 0 : i64, scratch_operands = 0 : i64, tpu.core_type = #tpu.core_type<tc>, window_params = [{transform_indices = @transform_0, window_bounds = array<i64: 128, 32>}, {pipeline_mode = #tpu.pipeline_mode<synchronous>, transform_indices = @transform_1, window_bounds = array<i64: 8, 32>}, {transform_indices = @transform_2, window_bounds = array<i64: 1, 128>}]} {
    %c0 = arith.constant 0 : index
    %c0_0 = arith.constant 0 : index
    %0 = vector.load %arg2[%c0, %c0_0] : memref<8x32xf32, #tpu.memory_space<vmem>>, vector<8x32xf32>
    %c0_1 = arith.constant 0 : index
    %c0_2 = arith.constant 0 : index
    %1 = vector.load %arg1[%c0_1, %c0_2] : memref<128x32xf32, #tpu.memory_space<vmem>>, vector<128x32xf32>
    %cst = arith.constant dense<0.000000e+00> : vector<8x128xf32>
    %2 = tpu.matmul %0, %1, %cst {dimension_numbers = #tpu.dot_dimension_numbers<[1], [1], [0], [0], [0, 0, 1, 0], [], []>, precision = #tpu.contract_precision<fp32>} : vector<8x32xf32>, vector<128x32xf32>, vector<8x128xf32> -> vector<8x128xf32>
    %3 = vector.extract_strided_slice %2 {offsets = [0, 0], sizes = [1, 128], strides = [1, 1]} : vector<8x128xf32> to vector<1x128xf32>
    %c0_3 = arith.constant 0 : index
    %c0_4 = arith.constant 0 : index
    %4 = vector.load %arg3[%c0_3, %c0_4] : memref<1x128xf32, #tpu.memory_space<vmem>>, vector<1x128xf32>
    tpu.vector_store %arg3[%c0_3, %c0_4], %3 {strides = array<i32>} : memref<1x128xf32, #tpu.memory_space<vmem>>, vector<1x128xf32>,
    return
  }
  func.func @transform_0(%arg0: i32) -> (i32, i32) {
    %c0_i32 = arith.constant 0 : i32
    %c0_i32_0 = arith.constant 0 : i32
    return %arg0, %c0_i32 : i32, i32
  }
  func.func @transform_1(%arg0: i32) -> (i32, i32) {
    %c0_i32 = arith.constant 0 : i32
    %c0_i32_0 = arith.constant 0 : i32
    %c0_i32_1 = arith.constant 0 : i32
    return %c0_i32, %c0_i32_0 : i32, i32
  }
  func.func @transform_2(%arg0: i32) -> (i32, i32) {
    %c0_i32 = arith.constant 0 : i32
    %c0_i32_0 = arith.constant 0 : i32
    return %c0_i32, %arg0 : i32, i32
  }
}

</mosaic_0001>

<llo_original>
// kernel: tpu_custom_call.1
$region0: #{tpu_custom_call.1}
  #allocation0 [shape = 'u32[]', space=smem, size = 0x4, offset = 0x4, fixed_abs, tag = 'smem constant byte address 0x4 - core index']
  #allocation1 [shape = 'u32[72,128]{1,0:T(1,128)}', space=vmem, size = 0x9000, scoped, tag = 'internal scratch']
  %s0 = inlined_call_operand.hbm [shape: f32[4,32], index: 0, kind: input, shape index: {}]
  %s1 = inlined_call_operand.hbm [shape: f32[8,32], index: 1, kind: input, shape index: {}]
  %s2 = inlined_call_operand.hbm [shape: f32[1,4], index: 2, kind: output, shape index: {}]
  %s3 = sld [smem:[#allocation0]]
  $region26: #{tpu_custom_call.1} parent=0
    _
  %s5 = ssub.s32 1, %s3
  %s6 = scalar_select 0, %s5, %s3
  $region1: #{tpu_custom_call.1} parent=0
    #allocation2 [shape = 'u8[65536]{0}', space=vmem, size = 0x10000, scoped, tag = 'input window, operand 0, single buffered']
    #allocation3 [shape = 's32[1]{0}', space=sflag, size = 0x4, scoped, tag = 'scoped memory for tpu_custom_call.1']
    #allocation4 [shape = 's32[1]{0}', space=sflag, size = 0x4, scoped, tag = 'scoped memory for tpu_custom_call.1']
    #allocation5 [shape = 'u8[4096]{0}', space=vmem, size = 0x1000, scoped, tag = 'input window, operand 1, single buffered']
    #allocation6 [shape = 's32[1]{0}', space=sflag, size = 0x4, scoped, tag = 'scoped memory for tpu_custom_call.1']
    #allocation7 [shape = 'u8[512]{0}', space=vmem, size = 0x400, scoped, tag = 'output window, operand 0, single buffered']
    %7 = vsyncpa [#allocation3], 0
    %8 = vsyncpa [#allocation6], 0
    %9 = vsyncpa [#allocation4], 0
    // Predicated region
    $region2: #{tpu_custom_call.1} parent=1 // pred_check
      _
    $region3: #{tpu_custom_call.1} parent=1 // pred_check_branch
      %11 = sbr.rel (0) target = $region5
    $region4: #{tpu_custom_call.1} parent=1 // pred_region
      %13 = vsyncadd [#allocation3], 1984
      %s14 = sshll.u32 %s0, 4
      %s15 = int_to_ptr.hbm [resolvable:$true] %s14
      %s16 = sshll.u32 [#allocation2], 4
      %s17 = int_to_ptr.vmem [resolvable:$true] %s16
      %22 = dma.hbm_to_vmem [thread:$0]  %s15, 64, %s17, [#allocation3], 64, 64, 4
    $region5: #{tpu_custom_call.1} parent=1 // pred_fallthru
      _
    // Predicated region
    $region6: #{tpu_custom_call.1} parent=1 // pred_check
      _
    $region7: #{tpu_custom_call.1} parent=1 // pred_check_branch
      %24 = sbr.rel (0) target = $region9
    $region8: #{tpu_custom_call.1} parent=1 // pred_region
      %26 = vsyncadd [#allocation6], 0
      %s28 = sshll.u32 %s1, 4
      %s29 = int_to_ptr.hbm [resolvable:$true] %s28
      %s30 = sshll.u32 [#allocation5], 4
      %s31 = int_to_ptr.vmem [resolvable:$true] %s30
      %33 = dma.hbm_to_vmem [thread:$0]  %s29, 128, %s31, [#allocation6]
    $region9: #{tpu_custom_call.1} parent=1 // pred_fallthru
      _
    // Predicated region
    $region10: #{tpu_custom_call.1} parent=1 // pred_check
      _
    $region11: #{tpu_custom_call.1} parent=1 // pred_check_branch
      %35 = sbr.rel (0) target = $region13
    $region12: #{tpu_custom_call.1} parent=1 // pred_region
      %37 = dma.done [#allocation3], 2048
    $region13: #{tpu_custom_call.1} parent=1 // pred_fallthru
      _
    // Predicated region
    $region14: #{tpu_custom_call.1} parent=1 // pred_check
      _
    $region15: #{tpu_custom_call.1} parent=1 // pred_check_branch
      %39 = sbr.rel (0) target = $region17
    $region16: #{tpu_custom_call.1} parent=1 // pred_region
      %41 = dma.done [#allocation6], 128
    $region17: #{tpu_custom_call.1} parent=1 // pred_fallthru
      _
    %v42 = vld [vmem:[#allocation5] sm:$0xff]
    %v43 = vld [vmem:[#allocation2] sm:$0xff]
    %v44 = vld [vmem:[#allocation2 + $0x8] sm:$0xff]
    %v45 = vld [vmem:[#allocation2 + $0x10] sm:$0xff]
    %v46 = vld [vmem:[#allocation2 + $0x18] sm:$0xff]
    %v47 = vld [vmem:[#allocation2 + $0x20] sm:$0xff]
    %v48 = vld [vmem:[#allocation2 + $0x28] sm:$0xff]
    %v49 = vld [vmem:[#allocation2 + $0x30] sm:$0xff]
    %v50 = vld [vmem:[#allocation2 + $0x38] sm:$0xff]
    %v51 = vld [vmem:[#allocation2 + $0x40] sm:$0xff]
    %v52 = vld [vmem:[#allocation2 + $0x48] sm:$0xff]
    %v53 = vld [vmem:[#allocation2 + $0x50] sm:$0xff]
    %v54 = vld [vmem:[#allocation2 + $0x58] sm:$0xff]
    %v55 = vld [vmem:[#allocation2 + $0x60] sm:$0xff]
    %v56 = vld [vmem:[#allocation2 + $0x68] sm:$0xff]
    %v57 = vld [vmem:[#allocation2 + $0x70] sm:$0xff]
    %v58 = vld [vmem:[#allocation2 + $0x78] sm:$0xff]
    %vm59 = vcmask 261120
    %v61 = vsel %vm59, %v42, 0
    %v64 = vsel %vm59, %v43, 0
    %v67 = vsel %vm59, %v44, 0
    %v70 = vsel %vm59, %v45, 0
    %v73 = vsel %vm59, %v46, 0
    %v76 = vsel %vm59, %v47, 0
    %v79 = vsel %vm59, %v48, 0
    %v82 = vsel %vm59, %v49, 0
    %v85 = vsel %vm59, %v50, 0
    %v88 = vsel %vm59, %v51, 0
    %v91 = vsel %vm59, %v52, 0
    %v94 = vsel %vm59, %v53, 0
    %v97 = vsel %vm59, %v54, 0
    %v100 = vsel %vm59, %v55, 0
    %v103 = vsel %vm59, %v56, 0
    %v106 = vsel %vm59, %v57, 0
    %v109 = vsel %vm59, %v58, 0
    %v111 = vand.u32 %v109, 4294901760
    %112 = vmatpush.xpose.msra.mxu0 %v111
    %v113 = vand.u32 %v106, 4294901760
    %114 = vmatpush.xpose.msra.mxu0 %v113
    %v115 = vand.u32 %v103, 4294901760
    %116 = vmatpush.xpose.msra.mxu0 %v115
    %v117 = vand.u32 %v100, 4294901760
    %118 = vmatpush.xpose.msra.mxu0 %v117
    %v119 = vand.u32 %v97, 4294901760
    %120 = vmatpush.xpose.msra.mxu0 %v119
    %v121 = vand.u32 %v94, 4294901760
    %122 = vmatpush.xpose.msra.mxu0 %v121
    %v123 = vand.u32 %v91, 4294901760
    %124 = vmatpush.xpose.msra.mxu0 %v123
    %v125 = vand.u32 %v88, 4294901760
    %126 = vmatpush.xpose.msra.mxu0 %v125
    %v127 = vand.u32 %v85, 4294901760
    %128 = vmatpush.xpose.msra.mxu0 %v127
    %v129 = vand.u32 %v82, 4294901760
    %130 = vmatpush.xpose.msra.mxu0 %v129
    %v131 = vand.u32 %v79, 4294901760
    %132 = vmatpush.xpose.msra.mxu0 %v131
    %v133 = vand.u32 %v76, 4294901760
    %134 = vmatpush.xpose.msra.mxu0 %v133
    %v135 = vand.u32 %v73, 4294901760
    %136 = vmatpush.xpose.msra.mxu0 %v135
    %v137 = vand.u32 %v70, 4294901760
    %138 = vmatpush.xpose.msra.mxu0 %v137
    %v139 = vand.u32 %v67, 4294901760
    %140 = vmatpush.xpose.msra.mxu0 %v139
    %v141 = vand.u32 %v64, 4294901760
    %142 = vmatpush.xpose.msra.mxu0 %v141
    %v143 = vand.u32 %v61, 4294901760
    %v144 = vsub.f32 %v61, %v143
    %v145 = vand.u32 %v144, 4294901760
    %v146 = vsub.f32 %v144, %v145
    %v147 = vand.u32 %v146, 4294901760
    %148 = vmatmul.f32.gmra.mxu0 %v147
    %v149 = vpop.f32.mrf.mxu0
    %v150 = vadd.f32 0.0, %v149
    %151 = vdwg.mxu0
    %v152 = vand.u32 %v109, 4294901760
    %v153 = vsub.f32 %v109, %v152
    %v154 = vand.u32 %v153, 4294901760
    %v155 = vsub.f32 %v153, %v154
    %v156 = vand.u32 %v155, 4294901760
    %157 = vmatpush.xpose.msra.mxu0 %v156
    %v158 = vand.u32 %v106, 4294901760
    %v159 = vsub.f32 %v106, %v158
    %v160 = vand.u32 %v159, 4294901760
    %v161 = vsub.f32 %v159, %v160
    %v162 = vand.u32 %v161, 4294901760
    %163 = vmatpush.xpose.msra.mxu0 %v162
    %v164 = vand.u32 %v103, 4294901760
    %v165 = vsub.f32 %v103, %v164
    %v166 = vand.u32 %v165, 4294901760
    %v167 = vsub.f32 %v165, %v166
    %v168 = vand.u32 %v167, 4294901760
    %169 = vmatpush.xpose.msra.mxu0 %v168
    %v170 = vand.u32 %v100, 4294901760
    %v171 = vsub.f32 %v100, %v170
    %v172 = vand.u32 %v171, 4294901760
    %v173 = vsub.f32 %v171, %v172
    %v174 = vand.u32 %v173, 4294901760
    %175 = vmatpush.xpose.msra.mxu0 %v174
    %v176 = vand.u32 %v97, 4294901760
    %v177 = vsub.f32 %v97, %v176
    %v178 = vand.u32 %v177, 4294901760
    %v179 = vsub.f32 %v177, %v178
    %v180 = vand.u32 %v179, 4294901760
    %181 = vmatpush.xpose.msra.mxu0 %v180
    %v182 = vand.u32 %v94, 4294901760
    %v183 = vsub.f32 %v94, %v182
    %v184 = vand.u32 %v183, 4294901760
    %v185 = vsub.f32 %v183, %v184
    %v186 = vand.u32 %v185, 4294901760
    %187 = vmatpush.xpose.msra.mxu0 %v186
    %v188 = vand.u32 %v91, 4294901760
    %v189 = vsub.f32 %v91, %v188
    %v190 = vand.u32 %v189, 4294901760
    %v191 = vsub.f32 %v189, %v190
    %v192 = vand.u32 %v191, 4294901760
    %193 = vmatpush.xpose.msra.mxu0 %v192
    %v194 = vand.u32 %v88, 4294901760
    %v195 = vsub.f32 %v88, %v194
    %v196 = vand.u32 %v195, 4294901760
    %v197 = vsub.f32 %v195, %v196
    %v198 = vand.u32 %v197, 4294901760
    %199 = vmatpush.xpose.msra.mxu0 %v198
    %v200 = vand.u32 %v85, 4294901760
    %v201 = vsub.f32 %v85, %v200
    %v202 = vand.u32 %v201, 4294901760
    %v203 = vsub.f32 %v201, %v202
    %v204 = vand.u32 %v203, 4294901760
    %205 = vmatpush.xpose.msra.mxu0 %v204
    %v206 = vand.u32 %v82, 4294901760
    %v207 = vsub.f32 %v82, %v206
    %v208 = vand.u32 %v207, 4294901760
    %v209 = vsub.f32 %v207, %v208
    %v210 = vand.u32 %v209, 4294901760
    %211 = vmatpush.xpose.msra.mxu0 %v210
    %v212 = vand.u32 %v79, 4294901760
    %v213 = vsub.f32 %v79, %v212
    %v214 = vand.u32 %v213, 4294901760
    %v215 = vsub.f32 %v213, %v214
    %v216 = vand.u32 %v215, 4294901760
    %217 = vmatpush.xpose.msra.mxu0 %v216
    %v218 = vand.u32 %v76, 4294901760
    %v219 = vsub.f32 %v76, %v218
    %v220 = vand.u32 %v219, 4294901760
    %v221 = vsub.f32 %v219, %v220
    %v222 = vand.u32 %v221, 4294901760
    %223 = vmatpush.xpose.msra.mxu0 %v222
    %v224 = vand.u32 %v73, 4294901760
    %v225 = vsub.f32 %v73, %v224
    %v226 = vand.u32 %v225, 4294901760
    %v227 = vsub.f32 %v225, %v226
    %v228 = vand.u32 %v227, 4294901760
    %229 = vmatpush.xpose.msra.mxu0 %v228
    %v230 = vand.u32 %v70, 4294901760
    %v231 = vsub.f32 %v70, %v230
    %v232 = vand.u32 %v231, 4294901760
    %v233 = vsub.f32 %v231, %v232
    %v234 = vand.u32 %v233, 4294901760
    %235 = vmatpush.xpose.msra.mxu0 %v234
    %v236 = vand.u32 %v67, 4294901760
    %v237 = vsub.f32 %v67, %v236
    %v238 = vand.u32 %v237, 4294901760
    %v239 = vsub.f32 %v237, %v238
    %v240 = vand.u32 %v239, 4294901760
    %241 = vmatpush.xpose.msra.mxu0 %v240
    %v242 = vand.u32 %v64, 4294901760
    %v243 = vsub.f32 %v64, %v242
    %v244 = vand.u32 %v243, 4294901760
    %v245 = vsub.f32 %v243, %v244
    %v246 = vand.u32 %v245, 4294901760
    %247 = vmatpush.xpose.msra.mxu0 %v246
    %v248 = vand.u32 %v61, 4294901760
    %249 = vmatmul.f32.gmra.mxu0 %v248
    %v250 = vpop.f32.mrf.mxu0
    %v251 = vadd.f32 %v150, %v250
    %252 = vdwg.mxu0
    %v253 = vand.u32 %v109, 4294901760
    %v254 = vsub.f32 %v109, %v253
    %255 = vmatpush.xpose.msra.mxu0 %v254
    %v256 = vand.u32 %v106, 4294901760
    %v257 = vsub.f32 %v106, %v256
    %258 = vmatpush.xpose.msra.mxu0 %v257
    %v259 = vand.u32 %v103, 4294901760
    %v260 = vsub.f32 %v103, %v259
    %261 = vmatpush.xpose.msra.mxu0 %v260
    %v262 = vand.u32 %v100, 4294901760
    %v263 = vsub.f32 %v100, %v262
    %264 = vmatpush.xpose.msra.mxu0 %v263
    %v265 = vand.u32 %v97, 4294901760
    %v266 = vsub.f32 %v97, %v265
    %267 = vmatpush.xpose.msra.mxu0 %v266
    %v268 = vand.u32 %v94, 4294901760
    %v269 = vsub.f32 %v94, %v268
    %270 = vmatpush.xpose.msra.mxu0 %v269
    %v271 = vand.u32 %v91, 4294901760
    %v272 = vsub.f32 %v91, %v271
    %273 = vmatpush.xpose.msra.mxu0 %v272
    %v274 = vand.u32 %v88, 4294901760
    %v275 = vsub.f32 %v88, %v274
    %276 = vmatpush.xpose.msra.mxu0 %v275
    %v277 = vand.u32 %v85, 4294901760
    %v278 = vsub.f32 %v85, %v277
    %279 = vmatpush.xpose.msra.mxu0 %v278
    %v280 = vand.u32 %v82, 4294901760
    %v281 = vsub.f32 %v82, %v280
    %282 = vmatpush.xpose.msra.mxu0 %v281
    %v283 = vand.u32 %v79, 4294901760
    %v284 = vsub.f32 %v79, %v283
    %285 = vmatpush.xpose.msra.mxu0 %v284
    %v286 = vand.u32 %v76, 4294901760
    %v287 = vsub.f32 %v76, %v286
    %288 = vmatpush.xpose.msra.mxu0 %v287
    %v289 = vand.u32 %v73, 4294901760
    %v290 = vsub.f32 %v73, %v289
    %291 = vmatpush.xpose.msra.mxu0 %v290
    %v292 = vand.u32 %v70, 4294901760
    %v293 = vsub.f32 %v70, %v292
    %294 = vmatpush.xpose.msra.mxu0 %v293
    %v295 = vand.u32 %v67, 4294901760
    %v296 = vsub.f32 %v67, %v295
    %297 = vmatpush.xpose.msra.mxu0 %v296
    %v298 = vand.u32 %v64, 4294901760
    %v299 = vsub.f32 %v64, %v298
    %300 = vmatpush.xpose.msra.mxu0 %v299
    %v301 = vand.u32 %v61, 4294901760
    %v302 = vsub.f32 %v61, %v301
    %303 = vmatmul.f32.gmra.mxu0 %v302
    %v304 = vpop.f32.mrf.mxu0
    %v305 = vadd.f32 %v251, %v304
    %306 = vdwg.mxu0
    %v307 = vand.u32 %v109, 4294901760
    %308 = vmatpush.xpose.msra.mxu0 %v307
    %v309 = vand.u32 %v106, 4294901760
    %310 = vmatpush.xpose.msra.mxu0 %v309
    %v311 = vand.u32 %v103, 4294901760
    %312 = vmatpush.xpose.msra.mxu0 %v311
    %v313 = vand.u32 %v100, 4294901760
    %314 = vmatpush.xpose.msra.mxu0 %v313
    %v315 = vand.u32 %v97, 4294901760
    %316 = vmatpush.xpose.msra.mxu0 %v315
    %v317 = vand.u32 %v94, 4294901760
    %318 = vmatpush.xpose.msra.mxu0 %v317
    %v319 = vand.u32 %v91, 4294901760
    %320 = vmatpush.xpose.msra.mxu0 %v319
    %v321 = vand.u32 %v88, 4294901760
    %322 = vmatpush.xpose.msra.mxu0 %v321
    %v323 = vand.u32 %v85, 4294901760
    %324 = vmatpush.xpose.msra.mxu0 %v323
    %v325 = vand.u32 %v82, 4294901760
    %326 = vmatpush.xpose.msra.mxu0 %v325
    %v327 = vand.u32 %v79, 4294901760
    %328 = vmatpush.xpose.msra.mxu0 %v327
    %v329 = vand.u32 %v76, 4294901760
    %330 = vmatpush.xpose.msra.mxu0 %v329
    %v331 = vand.u32 %v73, 4294901760
    %332 = vmatpush.xpose.msra.mxu0 %v331
    %v333 = vand.u32 %v70, 4294901760
    %334 = vmatpush.xpose.msra.mxu0 %v333
    %v335 = vand.u32 %v67, 4294901760
    %336 = vmatpush.xpose.msra.mxu0 %v335
    %v337 = vand.u32 %v64, 4294901760
    %338 = vmatpush.xpose.msra.mxu0 %v337
    %v339 = vand.u32 %v61, 4294901760
    %v340 = vsub.f32 %v61, %v339
    %v341 = vand.u32 %v340, 4294901760
    %342 = vmatmul.f32.gmra.mxu0 %v341
    %v343 = vpop.f32.mrf.mxu0
    %v344 = vadd.f32 %v305, %v343
    %345 = vdwg.mxu0
    %v346 = vand.u32 %v109, 4294901760
    %v347 = vsub.f32 %v109, %v346
    %v348 = vand.u32 %v347, 4294901760
    %349 = vmatpush.xpose.msra.mxu0 %v348
    %v350 = vand.u32 %v106, 4294901760
    %v351 = vsub.f32 %v106, %v350
    %v352 = vand.u32 %v351, 4294901760
    %353 = vmatpush.xpose.msra.mxu0 %v352
    %v354 = vand.u32 %v103, 4294901760
    %v355 = vsub.f32 %v103, %v354
    %v356 = vand.u32 %v355, 4294901760
    %357 = vmatpush.xpose.msra.mxu0 %v356
    %v358 = vand.u32 %v100, 4294901760
    %v359 = vsub.f32 %v100, %v358
    %v360 = vand.u32 %v359, 4294901760
    %361 = vmatpush.xpose.msra.mxu0 %v360
    %v362 = vand.u32 %v97, 4294901760
    %v363 = vsub.f32 %v97, %v362
    %v364 = vand.u32 %v363, 4294901760
    %365 = vmatpush.xpose.msra.mxu0 %v364
    %v366 = vand.u32 %v94, 4294901760
    %v367 = vsub.f32 %v94, %v366
    %v368 = vand.u32 %v367, 4294901760
    %369 = vmatpush.xpose.msra.mxu0 %v368
    %v370 = vand.u32 %v91, 4294901760
    %v371 = vsub.f32 %v91, %v370
    %v372 = vand.u32 %v371, 4294901760
    %373 = vmatpush.xpose.msra.mxu0 %v372
    %v374 = vand.u32 %v88, 4294901760
    %v375 = vsub.f32 %v88, %v374
    %v376 = vand.u32 %v375, 4294901760
    %377 = vmatpush.xpose.msra.mxu0 %v376
    %v378 = vand.u32 %v85, 4294901760
    %v379 = vsub.f32 %v85, %v378
    %v380 = vand.u32 %v379, 4294901760
    %381 = vmatpush.xpose.msra.mxu0 %v380
    %v382 = vand.u32 %v82, 4294901760
    %v383 = vsub.f32 %v82, %v382
    %v384 = vand.u32 %v383, 4294901760
    %385 = vmatpush.xpose.msra.mxu0 %v384
    %v386 = vand.u32 %v79, 4294901760
    %v387 = vsub.f32 %v79, %v386
    %v388 = vand.u32 %v387, 4294901760
    %389 = vmatpush.xpose.msra.mxu0 %v388
    %v390 = vand.u32 %v76, 4294901760
    %v391 = vsub.f32 %v76, %v390
    %v392 = vand.u32 %v391, 4294901760
    %393 = vmatpush.xpose.msra.mxu0 %v392
    %v394 = vand.u32 %v73, 4294901760
    %v395 = vsub.f32 %v73, %v394
    %v396 = vand.u32 %v395, 4294901760
    %397 = vmatpush.xpose.msra.mxu0 %v396
    %v398 = vand.u32 %v70, 4294901760
    %v399 = vsub.f32 %v70, %v398
    %v400 = vand.u32 %v399, 4294901760
    %401 = vmatpush.xpose.msra.mxu0 %v400
    %v402 = vand.u32 %v67, 4294901760
    %v403 = vsub.f32 %v67, %v402
    %v404 = vand.u32 %v403, 4294901760
    %405 = vmatpush.xpose.msra.mxu0 %v404
    %v406 = vand.u32 %v64, 4294901760
    %v407 = vsub.f32 %v64, %v406
    %v408 = vand.u32 %v407, 4294901760
    %409 = vmatpush.xpose.msra.mxu0 %v408
    %v410 = vand.u32 %v61, 4294901760
    %411 = vmatmul.f32.gmra.mxu0 %v410
    %v412 = vpop.f32.mrf.mxu0
    %v413 = vadd.f32 %v344, %v412
    %414 = vdwg.mxu0
    %v415 = vand.u32 %v109, 4294901760
    %416 = vmatpush.xpose.msra.mxu0 %v415
    %v417 = vand.u32 %v106, 4294901760
    %418 = vmatpush.xpose.msra.mxu0 %v417
    %v419 = vand.u32 %v103, 4294901760
    %420 = vmatpush.xpose.msra.mxu0 %v419
    %v421 = vand.u32 %v100, 4294901760
    %422 = vmatpush.xpose.msra.mxu0 %v421
    %v423 = vand.u32 %v97, 4294901760
    %424 = vmatpush.xpose.msra.mxu0 %v423
    %v425 = vand.u32 %v94, 4294901760
    %426 = vmatpush.xpose.msra.mxu0 %v425
    %v427 = vand.u32 %v91, 4294901760
    %428 = vmatpush.xpose.msra.mxu0 %v427
    %v429 = vand.u32 %v88, 4294901760
    %430 = vmatpush.xpose.msra.mxu0 %v429
    %v431 = vand.u32 %v85, 4294901760
    %432 = vmatpush.xpose.msra.mxu0 %v431
    %v433 = vand.u32 %v82, 4294901760
    %434 = vmatpush.xpose.msra.mxu0 %v433
    %v435 = vand.u32 %v79, 4294901760
    %436 = vmatpush.xpose.msra.mxu0 %v435
    %v437 = vand.u32 %v76, 4294901760
    %438 = vmatpush.xpose.msra.mxu0 %v437
    %v439 = vand.u32 %v73, 4294901760
    %440 = vmatpush.xpose.msra.mxu0 %v439
    %v441 = vand.u32 %v70, 4294901760
    %442 = vmatpush.xpose.msra.mxu0 %v441
    %v443 = vand.u32 %v67, 4294901760
    %444 = vmatpush.xpose.msra.mxu0 %v443
    %v445 = vand.u32 %v64, 4294901760
    %446 = vmatpush.xpose.msra.mxu0 %v445
    %v447 = vand.u32 %v61, 4294901760
    %448 = vmatmul.f32.gmra.mxu0 %v447
    %v449 = vpop.f32.mrf.mxu0
    %v450 = vadd.f32 %v413, %v449
    %451 = vdwg.mxu0
    %452 = vst [vmem:[#allocation7] sm:$0x1] %v450
    // Predicated region
    $region18: #{tpu_custom_call.1} parent=1 // pred_check
      _
    $region19: #{tpu_custom_call.1} parent=1 // pred_check_branch
      %454 = sbr.rel (0) target = $region21
    $region20: #{tpu_custom_call.1} parent=1 // pred_region
      %456 = vsyncadd [#allocation4], 0
      %s458 = sshll.u32 [#allocation7], 4
      %s459 = int_to_ptr.vmem [resolvable:$true] %s458
      %s460 = sshll.u32 %s2, 4
      %s461 = int_to_ptr.hbm [resolvable:$true] %s460
      %463 = dma.vmem_to_hbm [thread:$0]  %s459, 16, %s461, [#allocation4]
    $region21: #{tpu_custom_call.1} parent=1 // pred_fallthru
      _
    // Predicated region
    $region22: #{tpu_custom_call.1} parent=1 // pred_check
      _
    $region23: #{tpu_custom_call.1} parent=1 // pred_check_branch
      %465 = sbr.rel (0) target = $region25
    $region24: #{tpu_custom_call.1} parent=1 // pred_region
      %467 = dma.done [#allocation4], 16
    $region25: #{tpu_custom_call.1} parent=1 // pred_fallthru
      _
    %468 = vsyncpa [#allocation3], 1
    %469 = vsyncpa [#allocation6], 1
    %470 = vsyncpa [#allocation4], 1

</llo_original>
